<compile_context>
chip_gen: v5e
topology: v5e:2x2
jax: 0.10.0
libtpu: 0.0.40
codegen_flags: <defaults>
</compile_context>

<pallas_src>
import math

import jax
import jax.numpy as jnp
from jax.experimental import pallas as pl
from jax.experimental.pallas import tpu as pltpu


def _make_attention_kernel(scale, num_heads, head_e, head_d, mask_mode, out_attn):
    """Builds a kernel variant.

    mask_mode: "none" | "shared" (L_t, S) | "per_head" (H, L_t, S)
    out_attn : whether the (H, L_t, S) attention-weights output block exists.
    """

    def kernel(*refs):
        q_ref, k_ref, v_ref = refs[0], refs[1], refs[2]
        idx = 3
        m_ref = None
        if mask_mode != "none":
            m_ref = refs[idx]
            idx += 1
        o_ref = refs[idx]
        a_ref = refs[idx + 1] if out_attn else None

        scale_c = jnp.asarray(scale, dtype=q_ref.dtype)
        neg = jnp.float32(jnp.finfo(jnp.float32).min)

        masked_shared = None
        if mask_mode == "shared":
            masked_shared = m_ref[...] != 0            # (L_t, S), hoisted

        for h in range(num_heads):                     # static unroll (small H)
            # lane slices of the heads-merged layout (no sublane relayout)
            q_h = q_ref[:, h * head_e:(h + 1) * head_e] * scale_c   # (L_t, E)
            k_h = k_ref[:, h * head_e:(h + 1) * head_e]             # (S,  E)
            v_h = v_ref[:, h * head_d:(h + 1) * head_d]             # (S,  D)

            # scores = q_h @ k_h^T on the MXU (bf16/native operands, f32 acc)
            s = jax.lax.dot_general(
                q_h, k_h, (((1,), (1,)), ((), ())),
                preferred_element_type=jnp.float32)                 # (L_t, S)

            if mask_mode == "shared":
                s = jnp.where(masked_shared, neg, s)
            elif mask_mode == "per_head":
                s = jnp.where(m_ref[h] != 0, neg, s)

            # numerically stable softmax, f32 throughout
            row_max = jnp.max(s, axis=-1, keepdims=True)
            p = jnp.exp(s - row_max)
            denom = jnp.sum(p, axis=-1, keepdims=True)
            inv = pl.reciprocal(denom, approx=True)                 # EUP vrcp

            if a_ref is not None:
                a = p * inv                                          # (L_t, S)
                o_h = jnp.dot(a.astype(v_h.dtype), v_h,
                              preferred_element_type=jnp.float32)    # (L_t, D)
                a_ref[h] = a.astype(a_ref.dtype)
            else:
                # defer normalization past P.V: (L_t, D) mult instead of (L_t, S)
                o_h = jnp.dot(p.astype(v_h.dtype), v_h,
                              preferred_element_type=jnp.float32)
                o_h = o_h * inv

            # per-head store straight into the lane-dense (L_t, H*D) out slab
            o_ref[:, h * head_d:(h + 1) * head_d] = o_h.astype(o_ref.dtype)

    return kernel


def _vmem_limit_bytes():
    try:
        cap = int(pltpu.get_tpu_info().vmem_capacity_bytes)
    except Exception:
        cap = 64 * 1024 * 1024          # conservative fallback (v7x-sized)
    return min((cap * 3) // 4, 100 * 1024 * 1024)


def temporal_attention(queries, keys, values, attn_mask=None, *,
                       scale=None, output_attention=False, compute_dtype=None):
    """Pallas equivalent of TemporalAttention.forward (dropout = identity)."""
    B, L, H, E = queries.shape
    _, S, _, D = values.shape
    scale = float(scale) if scale is not None else 1.0 / math.sqrt(E)
    out_dtype = queries.dtype

    # matmul-operand dtype: bf16 for f32 inputs (softmax/accumulation stay f32)
    if compute_dtype is None:
        compute_dtype = jnp.bfloat16 if queries.dtype == jnp.float32 else queries.dtype

    # lane-dense layouts: heads merged onto the lane axis (free reshapes)
    q_in = queries.astype(compute_dtype).reshape(B, L, H * E)
    k_in = keys.astype(compute_dtype).reshape(B, S, H * E)
    v_in = values.astype(compute_dtype).reshape(B, S, H * D)
    in_bytes = jnp.dtype(compute_dtype).itemsize
    out_bytes = jnp.dtype(out_dtype).itemsize

    # ---- mask: int8, never materialized over broadcast batch / head dims ----
    if attn_mask is None:
        mask_mode, mask, mask_b = "none", None, 1
    else:
        m = jnp.asarray(attn_mask)
        if m.ndim == 2:                       # (L, S)
            m = m[None]                       # (1, L, S)
        if m.ndim == 4 and m.shape[1] == 1:   # (B?, 1, L, S): heads broadcast
            m = m[:, 0]
        mask_b = int(m.shape[0])              # 1 (broadcast over B) or B
        if m.ndim == 4:                       # genuinely per-head (B?, H, L, S)
            mask_mode = "per_head"
            mask = jnp.broadcast_to(m, (mask_b, H, L, S)).astype(jnp.int8)
        else:                                 # (B?, L, S) shared over heads
            mask_mode = "shared"
            mask = jnp.broadcast_to(m, (mask_b, L, S)).astype(jnp.int8)

    # ---- tiling: all heads + full S per step, L tiled under a VMEM budget ----
    vmem_limit = _vmem_limit_bytes()
    kv_double_buffered = 2 * S * H * (E + D) * in_bytes

    def _fits(lt):
        per = kv_double_buffered
        per += 2 * lt * H * E * in_bytes              # q block
        per += 2 * lt * H * D * out_bytes             # out slab block
        if mask_mode == "shared":
            per += 2 * lt * S
        elif mask_mode == "per_head":
            per += 2 * H * lt * S
        if output_attention:
            per += 2 * H * lt * S * out_bytes         # attention-weights block
        return per <= int(0.85 * vmem_limit)

    l_tile = min(8, L)
    for cand in (512, 256, 128, 64, 32, 16, 8):
        lt = min(cand, L)
        if _fits(lt):
            l_tile = lt
            break
    grid = (B, pl.cdiv(L, l_tile))

    # single-buffer K/V when double-buffered full-S K/V would crowd VMEM (v7x)
    kv_kwargs = {}
    if kv_double_buffered > vmem_limit // 3:
        kv_kwargs = dict(pipeline_mode=pl.Buffered(1))

    in_specs = [
        # q: (l_tile, H*E) lane-dense slab
        pl.BlockSpec((None, l_tile, H * E), lambda b, l: (b, l, 0)),
        # k/v: full sequence; index_map independent of l -> revisit-reused
        pl.BlockSpec((None, S, H * E), lambda b, l: (b, 0, 0), **kv_kwargs),
        pl.BlockSpec((None, S, H * D), lambda b, l: (b, 0, 0), **kv_kwargs),
    ]
    operands = [q_in, k_in, v_in]
    if mask_mode == "shared":
        in_specs.append(pl.BlockSpec(
            (None, l_tile, S),
            (lambda b, l: (0, l, 0)) if mask_b == 1 else (lambda b, l: (b, l, 0))))
        operands.append(mask)
    elif mask_mode == "per_head":
        in_specs.append(pl.BlockSpec(
            (None, H, l_tile, S),
            (lambda b, l: (0, 0, l, 0)) if mask_b == 1 else (lambda b, l: (b, 0, l, 0))))
        operands.append(mask)

    # main output as a lane-dense (B, L, H*D) slab (free reshape afterwards)
    out_shape = [jax.ShapeDtypeStruct((B, L, H * D), out_dtype)]
    out_specs = [pl.BlockSpec((None, l_tile, H * D), lambda b, l: (b, l, 0))]
    if output_attention:
        out_shape.append(jax.ShapeDtypeStruct((B, H, L, S), out_dtype))
        out_specs.append(pl.BlockSpec((None, H, l_tile, S), lambda b, l: (b, 0, l, 0)))

    mask_bytes = mask.size if mask is not None else 0
    attn_bytes = (B * H * L * S * out_bytes) if output_attention else 0
    cost = pl.CostEstimate(
        flops=2 * B * H * L * S * (E + D),
        transcendentals=B * H * L * S,
        bytes_accessed=(B * L * H * E + B * S * H * E + B * S * H * D) * in_bytes
                       + B * L * H * D * out_bytes + mask_bytes + attn_bytes)

    kernel = _make_attention_kernel(scale, H, E, D, mask_mode, output_attention)

    outs = pl.pallas_call(
        kernel,
        out_shape=out_shape,
        grid_spec=pltpu.PrefetchScalarGridSpec(
            num_scalar_prefetch=0,
            grid=grid,
            in_specs=in_specs,
            out_specs=out_specs,
        ),
        compiler_params=pltpu.CompilerParams(
            dimension_semantics=("parallel", "parallel"),
            vmem_limit_bytes=vmem_limit,
        ),
        cost_estimate=cost,
    )(*operands)

    if output_attention:
        out_slab, attn_w = outs
    else:
        out_slab = outs[0] if isinstance(outs, (list, tuple)) else outs
        attn_w = None

    V = out_slab.reshape(B, L, H, D)
    return V, attn_w


def _reference(queries, keys, values, attn_mask, scale=None, quantize_dtype=None):
    B, L, H, E = queries.shape
    scale = scale if scale is not None else 1.0 / math.sqrt(E)
    q, k, v = queries, keys, values
    if quantize_dtype is not None:   # emulate the wrapper's operand downcast
        q = q.astype(quantize_dtype).astype(jnp.float32)
        k = k.astype(quantize_dtype).astype(jnp.float32)
        v = v.astype(quantize_dtype).astype(jnp.float32)
    scores = jnp.einsum('blhe,bshe->bhls', q, k)
    if attn_mask is not None:
        m = jnp.asarray(attn_mask)
        if m.ndim == 2:
            m = m[None, None]
        elif m.ndim == 3:
            m = m[:, None]
        scores = jnp.where(m, jnp.finfo(scores.dtype).min, scores)
    A = jax.nn.softmax(scale * scores, axis=-1)
    V = jnp.einsum('bhls,bshd->blhd', A, v)
    return V, A


if __name__ == "__main__":
    key = jax.random.PRNGKey(0)
    B, L, S, H, E, D = 2, 16, 16, 4, 32, 32

    kq, kk, kv = jax.random.split(key, 3)
    queries = jax.random.normal(kq, (B, L, H, E), dtype=jnp.float32)
    keys = jax.random.normal(kk, (B, S, H, E), dtype=jnp.float32)
    values = jax.random.normal(kv, (B, S, H, D), dtype=jnp.float32)

    # ---- case 1: 2-D causal mask (kept un-broadcast over B in HBM), attention
    #      weights requested, full-f32 compute path -> tight tolerance ----
    causal = (jnp.arange(S)[None, :] > jnp.arange(L)[:, None])   # (L, S) bool
    V1, A1 = temporal_attention(queries, keys, values, causal,
                                output_attention=True, compute_dtype=jnp.float32)
    V1 = jax.block_until_ready(V1)
    A1 = jax.block_until_ready(A1)
    V1_ref, A1_ref = _reference(queries, keys, values, causal)
    assert V1.shape == (B, L, H, D) and A1.shape == (B, H, L, S)
    assert jnp.allclose(V1, V1_ref, atol=5e-3, rtol=5e-3), "V mismatch (case 1)"
    assert jnp.allclose(A1, A1_ref, atol=5e-3, rtol=5e-3), "A mismatch (case 1)"

    # ---- case 2: no mask, default bf16 matmul operands, attention output
    #      elided, deferred softmax normalization ----
    V2, A2 = temporal_attention(queries, keys, values, None,
                                output_attention=False)
    V2 = jax.block_until_ready(V2)
    V2_ref, _ = _reference(queries, keys, values, None, quantize_dtype=jnp.bfloat16)
    assert A2 is None
    assert jnp.allclose(V2, V2_ref, atol=2e-2, rtol=2e-2), "V mismatch (case 2)"

    # ---- case 3: genuine per-head (B, H, L, S) mask, default bf16 path ----
    mask4 = jax.random.bernoulli(jax.random.PRNGKey(1), 0.25, (B, H, L, S))
    mask4 = mask4.at[..., 0].set(False)   # avoid fully-masked rows
    V3, _ = temporal_attention(queries, keys, values, mask4,
                               output_attention=False)
    V3 = jax.block_until_ready(V3)
    V3_ref, _ = _reference(queries, keys, values, mask4, quantize_dtype=jnp.bfloat16)
    assert jnp.allclose(V3, V3_ref, atol=2e-2, rtol=2e-2), "V mismatch (case 3)"

    # ---- case 4: (B, 1, L, S) head-broadcast mask -> stored head-shared,
    #      attention weights on the bf16 path ----
    mask_b1 = jnp.broadcast_to(causal[None, None], (B, 1, L, S))
    V4, A4 = temporal_attention(queries, keys, values, mask_b1,
                                output_attention=True)
    V4 = jax.block_until_ready(V4)
    A4 = jax.block_until_ready(A4)
    V4_ref, A4_ref = _reference(queries, keys, values, mask_b1,
                                quantize_dtype=jnp.bfloat16)
    assert jnp.allclose(V4, V4_ref, atol=2e-2, rtol=2e-2), "V mismatch (case 4)"
    assert jnp.allclose(A4, A4_ref, atol=2e-2, rtol=2e-2), "A mismatch (case 4)"

    print("KERNEL_OK")
</pallas_src>

<mosaic_0001>
module attributes {stable_mosaic.version = 11 : i64} {
  func.func @kernel(%arg0: i32, %arg1: i32, %arg2: memref<1x16x128xf32, #tpu.memory_space<vmem>>, %arg3: memref<1x16x128xf32, #tpu.memory_space<vmem>>, %arg4: memref<1x16x128xf32, #tpu.memory_space<vmem>>, %arg5: memref<1x16x16xi8, #tpu.memory_space<vmem>>, %arg6: memref<1x16x128xf32, #tpu.memory_space<vmem>>, %arg7: memref<1x4x16x16xf32, #tpu.memory_space<vmem>>) attributes {dimension_semantics = [#tpu.dimension_semantics<parallel>, #tpu.dimension_semantics<parallel>], iteration_bounds = array<i64: 2, 1>, scalar_prefetch = 0 : i64, scratch_operands = 0 : i64, tpu.core_type = #tpu.core_type<tc>, window_params = [{transform_indices = @transform_0, window_bounds = array<i64: 1, 16, 128>}, {transform_indices = @transform_1, window_bounds = array<i64: 1, 16, 128>}, {transform_indices = @transform_2, window_bounds = array<i64: 1, 16, 128>}, {transform_indices = @transform_3, window_bounds = array<i64: 1, 16, 16>}, {transform_indices = @transform_4, window_bounds = array<i64: 1, 16, 128>}, {transform_indices = @transform_5, window_bounds = array<i64: 1, 4, 16, 16>}]} {
    %c0 = arith.constant 0 : index
    %c0_0 = arith.constant 0 : index
    %c0_1 = arith.constant 0 : index
    %0 = vector.load %arg5[%c0, %c0_0, %c0_1] : memref<1x16x16xi8, #tpu.memory_space<vmem>>, vector<1x16x16xi8>
    %1 = vector.shape_cast %0 : vector<1x16x16xi8> to vector<16x16xi8>
    %c0_i8 = arith.constant 0 : i8
    %2 = vector.broadcast %c0_i8 : i8 to vector<16x16xi8>
    %3 = arith.cmpi ne, %1, %2 : vector<16x16xi8>
    %c0_2 = arith.constant 0 : index
    %c0_3 = arith.constant 0 : index
    %c0_4 = arith.constant 0 : index
    %4 = vector.load %arg2[%c0_2, %c0_3, %c0_4] : memref<1x16x128xf32, #tpu.memory_space<vmem>>, vector<1x16x32xf32>
    %5 = vector.shape_cast %4 : vector<1x16x32xf32> to vector<16x32xf32>
    %cst = arith.constant 0.176776692 : f32
    %6 = vector.broadcast %cst : f32 to vector<16x32xf32>
    %7 = arith.mulf %5, %6 : vector<16x32xf32>
    %c0_5 = arith.constant 0 : index
    %c0_6 = arith.constant 0 : index
    %c0_7 = arith.constant 0 : index
    %8 = vector.load %arg3[%c0_5, %c0_6, %c0_7] : memref<1x16x128xf32, #tpu.memory_space<vmem>>, vector<1x16x32xf32>
    %9 = vector.shape_cast %8 : vector<1x16x32xf32> to vector<16x32xf32>
    %c0_8 = arith.constant 0 : index
    %c0_9 = arith.constant 0 : index
    %c0_10 = arith.constant 0 : index
    %10 = vector.load %arg4[%c0_8, %c0_9, %c0_10] : memref<1x16x128xf32, #tpu.memory_space<vmem>>, vector<1x16x32xf32>
    %11 = vector.shape_cast %10 : vector<1x16x32xf32> to vector<16x32xf32>
    %cst_11 = arith.constant dense<0.000000e+00> : vector<16x16xf32>
    %12 = tpu.matmul %7, %9, %cst_11 {dimension_numbers = #tpu.dot_dimension_numbers<[1], [1], [0], [0], [0, 0, 1, 0], [], []>} : vector<16x32xf32>, vector<16x32xf32>, vector<16x16xf32> -> vector<16x16xf32>
    %cst_12 = arith.constant -3.40282347E+38 : f32
    %13 = vector.broadcast %cst_12 : f32 to vector<16x16xf32>
    %14 = arith.select %3, %13, %12 : vector<16x16xi1>, vector<16x16xf32>
    %cst_13 = arith.constant dense<0xFF800000> : vector<16xf32>
    %15 = vector.multi_reduction <maximumf>, %14, %cst_13 [1] : vector<16x16xf32> to vector<16xf32>
    %16 = vector.shape_cast %15 : vector<16xf32> to vector<16x1xf32>
    %17 = vector.broadcast %16 : vector<16x1xf32> to vector<16x16xf32>
    %18 = arith.subf %14, %17 : vector<16x16xf32>
    %19 = math.exp %18 : vector<16x16xf32>
    %cst_14 = arith.constant dense<0.000000e+00> : vector<16xf32>
    %20 = vector.multi_reduction <add>, %19, %cst_14 [1] : vector<16x16xf32> to vector<16xf32>
    %21 = vector.shape_cast %20 : vector<16xf32> to vector<16x1xf32>
    %22 = tpu.reciprocal %21 {approx = true} : vector<16x1xf32> -> vector<16x1xf32>
    %23 = vector.broadcast %22 : vector<16x1xf32> to vector<16x16xf32>
    %24 = arith.mulf %19, %23 : vector<16x16xf32>
    %cst_15 = arith.constant dense<0.000000e+00> : vector<16x32xf32>
    %25 = tpu.matmul %24, %11, %cst_15 {dimension_numbers = #tpu.dot_dimension_numbers<[1], [0], [0], [1], [0, 0, 1, 1], [], []>} : vector<16x16xf32>, vector<16x32xf32>, vector<16x32xf32> -> vector<16x32xf32>
    %c0_16 = arith.constant 0 : index
    %c0_17 = arith.constant 0 : index
    %c0_18 = arith.constant 0 : index
    %c0_19 = arith.constant 0 : index
    %26 = vector.load %arg7[%c0_16, %c0_17, %c0_18, %c0_19] : memref<1x4x16x16xf32, #tpu.memory_space<vmem>>, vector<1x1x16x16xf32>
    %27 = vector.shape_cast %26 : vector<1x1x16x16xf32> to vector<16x16xf32>
    %28 = vector.shape_cast %24 : vector<16x16xf32> to vector<1x1x16x16xf32>
    tpu.vector_store %arg7[%c0_16, %c0_17, %c0_18, %c0_19], %28 {strides = array<i32>} : memref<1x4x16x16xf32, #tpu.memory_space<vmem>>, vector<1x1x16x16xf32>,
    %c0_20 = arith.constant 0 : index
    %c0_21 = arith.constant 0 : index
    %c0_22 = arith.constant 0 : index
    %29 = vector.load %arg6[%c0_20, %c0_21, %c0_22] : memref<1x16x128xf32, #tpu.memory_space<vmem>>, vector<1x16x32xf32>
    %30 = vector.shape_cast %29 : vector<1x16x32xf32> to vector<16x32xf32>
    %31 = vector.shape_cast %25 : vector<16x32xf32> to vector<1x16x32xf32>
    tpu.vector_store %arg6[%c0_20, %c0_21, %c0_22], %31 {strides = array<i32>} : memref<1x16x128xf32, #tpu.memory_space<vmem>>, vector<1x16x32xf32>,
    %c0_23 = arith.constant 0 : index
    %c0_24 = arith.constant 0 : index
    %c32 = arith.constant 32 : index
    %32 = vector.load %arg2[%c0_23, %c0_24, %c32] : memref<1x16x128xf32, #tpu.memory_space<vmem>>, vector<1x16x32xf32>
    %33 = vector.shape_cast %32 : vector<1x16x32xf32> to vector<16x32xf32>
    %cst_25 = arith.constant 0.176776692 : f32
    %34 = vector.broadcast %cst_25 : f32 to vector<16x32xf32>
    %35 = arith.mulf %33, %34 : vector<16x32xf32>
    %c0_26 = arith.constant 0 : index
    %c0_27 = arith.constant 0 : index
    %c32_28 = arith.constant 32 : index
    %36 = vector.load %arg3[%c0_26, %c0_27, %c32_28] : memref<1x16x128xf32, #tpu.memory_space<vmem>>, vector<1x16x32xf32>
    %37 = vector.shape_cast %36 : vector<1x16x32xf32> to vector<16x32xf32>
    %c0_29 = arith.constant 0 : index
    %c0_30 = arith.constant 0 : index
    %c32_31 = arith.constant 32 : index
    %38 = vector.load %arg4[%c0_29, %c0_30, %c32_31] : memref<1x16x128xf32, #tpu.memory_space<vmem>>, vector<1x16x32xf32>
    %39 = vector.shape_cast %38 : vector<1x16x32xf32> to vector<16x32xf32>
    %cst_32 = arith.constant dense<0.000000e+00> : vector<16x16xf32>
    %40 = tpu.matmul %35, %37, %cst_32 {dimension_numbers = #tpu.dot_dimension_numbers<[1], [1], [0], [0], [0, 0, 1, 0], [], []>} : vector<16x32xf32>, vector<16x32xf32>, vector<16x16xf32> -> vector<16x16xf32>
    %cst_33 = arith.constant -3.40282347E+38 : f32
    %41 = vector.broadcast %cst_33 : f32 to vector<16x16xf32>
    %42 = arith.select %3, %41, %40 : vector<16x16xi1>, vector<16x16xf32>
    %cst_34 = arith.constant dense<0xFF800000> : vector<16xf32>
    %43 = vector.multi_reduction <maximumf>, %42, %cst_34 [1] : vector<16x16xf32> to vector<16xf32>
    %44 = vector.shape_cast %43 : vector<16xf32> to vector<16x1xf32>
    %45 = vector.broadcast %44 : vector<16x1xf32> to vector<16x16xf32>
    %46 = arith.subf %42, %45 : vector<16x16xf32>
    %47 = math.exp %46 : vector<16x16xf32>
    %cst_35 = arith.constant dense<0.000000e+00> : vector<16xf32>
    %48 = vector.multi_reduction <add>, %47, %cst_35 [1] : vector<16x16xf32> to vector<16xf32>
    %49 = vector.shape_cast %48 : vector<16xf32> to vector<16x1xf32>
    %50 = tpu.reciprocal %49 {approx = true} : vector<16x1xf32> -> vector<16x1xf32>
    %51 = vector.broadcast %50 : vector<16x1xf32> to vector<16x16xf32>
    %52 = arith.mulf %47, %51 : vector<16x16xf32>
    %cst_36 = arith.constant dense<0.000000e+00> : vector<16x32xf32>
    %53 = tpu.matmul %52, %39, %cst_36 {dimension_numbers = #tpu.dot_dimension_numbers<[1], [0], [0], [1], [0, 0, 1, 1], [], []>} : vector<16x16xf32>, vector<16x32xf32>, vector<16x32xf32> -> vector<16x32xf32>
    %c0_37 = arith.constant 0 : index
    %c1 = arith.constant 1 : index
    %c0_38 = arith.constant 0 : index
    %c0_39 = arith.constant 0 : index
    %54 = vector.load %arg7[%c0_37, %c1, %c0_38, %c0_39] : memref<1x4x16x16xf32, #tpu.memory_space<vmem>>, vector<1x1x16x16xf32>
    %55 = vector.shape_cast %54 : vector<1x1x16x16xf32> to vector<16x16xf32>
    %56 = vector.shape_cast %52 : vector<16x16xf32> to vector<1x1x16x16xf32>
    tpu.vector_store %arg7[%c0_37, %c1, %c0_38, %c0_39], %56 {strides = array<i32>} : memref<1x4x16x16xf32, #tpu.memory_space<vmem>>, vector<1x1x16x16xf32>,
    %c0_40 = arith.constant 0 : index
    %c0_41 = arith.constant 0 : index
    %c32_42 = arith.constant 32 : index
    %57 = vector.load %arg6[%c0_40, %c0_41, %c32_42] : memref<1x16x128xf32, #tpu.memory_space<vmem>>, vector<1x16x32xf32>
    %58 = vector.shape_cast %57 : vector<1x16x32xf32> to vector<16x32xf32>
    %59 = vector.shape_cast %53 : vector<16x32xf32> to vector<1x16x32xf32>
    tpu.vector_store %arg6[%c0_40, %c0_41, %c32_42], %59 {strides = array<i32>} : memref<1x16x128xf32, #tpu.memory_space<vmem>>, vector<1x16x32xf32>,
    %c0_43 = arith.constant 0 : index
    %c0_44 = arith.constant 0 : index
    %c64 = arith.constant 64 : index
    %60 = vector.load %arg2[%c0_43, %c0_44, %c64] : memref<1x16x128xf32, #tpu.memory_space<vmem>>, vector<1x16x32xf32>
    %61 = vector.shape_cast %60 : vector<1x16x32xf32> to vector<16x32xf32>
    %cst_45 = arith.constant 0.176776692 : f32
    %62 = vector.broadcast %cst_45 : f32 to vector<16x32xf32>
    %63 = arith.mulf %61, %62 : vector<16x32xf32>
    %c0_46 = arith.constant 0 : index
    %c0_47 = arith.constant 0 : index
    %c64_48 = arith.constant 64 : index
    %64 = vector.load %arg3[%c0_46, %c0_47, %c64_48] : memref<1x16x128xf32, #tpu.memory_space<vmem>>, vector<1x16x32xf32>
    %65 = vector.shape_cast %64 : vector<1x16x32xf32> to vector<16x32xf32>
    %c0_49 = arith.constant 0 : index
    %c0_50 = arith.constant 0 : index
    %c64_51 = arith.constant 64 : index
    %66 = vector.load %arg4[%c0_49, %c0_50, %c64_51] : memref<1x16x128xf32, #tpu.memory_space<vmem>>, vector<1x16x32xf32>
    %67 = vector.shape_cast %66 : vector<1x16x32xf32> to vector<16x32xf32>
    %cst_52 = arith.constant dense<0.000000e+00> : vector<16x16xf32>
    %68 = tpu.matmul %63, %65, %cst_52 {dimension_numbers = #tpu.dot_dimension_numbers<[1], [1], [0], [0], [0, 0, 1, 0], [], []>} : vector<16x32xf32>, vector<16x32xf32>, vector<16x16xf32> -> vector<16x16xf32>
    %cst_53 = arith.constant -3.40282347E+38 : f32
    %69 = vector.broadcast %cst_53 : f32 to vector<16x16xf32>
    %70 = arith.select %3, %69, %68 : vector<16x16xi1>, vector<16x16xf32>
    %cst_54 = arith.constant dense<0xFF800000> : vector<16xf32>
    %71 = vector.multi_reduction <maximumf>, %70, %cst_54 [1] : vector<16x16xf32> to vector<16xf32>
    %72 = vector.shape_cast %71 : vector<16xf32> to vector<16x1xf32>
    %73 = vector.broadcast %72 : vector<16x1xf32> to vector<16x16xf32>
    %74 = arith.subf %70, %73 : vector<16x16xf32>
    %75 = math.exp %74 : vector<16x16xf32>
    %cst_55 = arith.constant dense<0.000000e+00> : vector<16xf32>
    %76 = vector.multi_reduction <add>, %75, %cst_55 [1] : vector<16x16xf32> to vector<16xf32>
    %77 = vector.shape_cast %76 : vector<16xf32> to vector<16x1xf32>
    %78 = tpu.reciprocal %77 {approx = true} : vector<16x1xf32> -> vector<16x1xf32>
    %79 = vector.broadcast %78 : vector<16x1xf32> to vector<16x16xf32>
    %80 = arith.mulf %75, %79 : vector<16x16xf32>
    %cst_56 = arith.constant dense<0.000000e+00> : vector<16x32xf32>
    %81 = tpu.matmul %80, %67, %cst_56 {dimension_numbers = #tpu.dot_dimension_numbers<[1], [0], [0], [1], [0, 0, 1, 1], [], []>} : vector<16x16xf32>, vector<16x32xf32>, vector<16x32xf32> -> vector<16x32xf32>
    %c0_57 = arith.constant 0 : index
    %c2 = arith.constant 2 : index
    %c0_58 = arith.constant 0 : index
    %c0_59 = arith.constant 0 : index
    %82 = vector.load %arg7[%c0_57, %c2, %c0_58, %c0_59] : memref<1x4x16x16xf32, #tpu.memory_space<vmem>>, vector<1x1x16x16xf32>
    %83 = vector.shape_cast %82 : vector<1x1x16x16xf32> to vector<16x16xf32>
    %84 = vector.shape_cast %80 : vector<16x16xf32> to vector<1x1x16x16xf32>
    tpu.vector_store %arg7[%c0_57, %c2, %c0_58, %c0_59], %84 {strides = array<i32>} : memref<1x4x16x16xf32, #tpu.memory_space<vmem>>, vector<1x1x16x16xf32>,
    %c0_60 = arith.constant 0 : index
    %c0_61 = arith.constant 0 : index
    %c64_62 = arith.constant 64 : index
    %85 = vector.load %arg6[%c0_60, %c0_61, %c64_62] : memref<1x16x128xf32, #tpu.memory_space<vmem>>, vector<1x16x32xf32>
    %86 = vector.shape_cast %85 : vector<1x16x32xf32> to vector<16x32xf32>
    %87 = vector.shape_cast %81 : vector<16x32xf32> to vector<1x16x32xf32>
    tpu.vector_store %arg6[%c0_60, %c0_61, %c64_62], %87 {strides = array<i32>} : memref<1x16x128xf32, #tpu.memory_space<vmem>>, vector<1x16x32xf32>,
    %c0_63 = arith.constant 0 : index
    %c0_64 = arith.constant 0 : index
    %c96 = arith.constant 96 : index
    %88 = vector.load %arg2[%c0_63, %c0_64, %c96] : memref<1x16x128xf32, #tpu.memory_space<vmem>>, vector<1x16x32xf32>
    %89 = vector.shape_cast %88 : vector<1x16x32xf32> to vector<16x32xf32>
    %cst_65 = arith.constant 0.176776692 : f32
    %90 = vector.broadcast %cst_65 : f32 to vector<16x32xf32>
    %91 = arith.mulf %89, %90 : vector<16x32xf32>
    %c0_66 = arith.constant 0 : index
    %c0_67 = arith.constant 0 : index
    %c96_68 = arith.constant 96 : index
    %92 = vector.load %arg3[%c0_66, %c0_67, %c96_68] : memref<1x16x128xf32, #tpu.memory_space<vmem>>, vector<1x16x32xf32>
    %93 = vector.shape_cast %92 : vector<1x16x32xf32> to vector<16x32xf32>
    %c0_69 = arith.constant 0 : index
    %c0_70 = arith.constant 0 : index
    %c96_71 = arith.constant 96 : index
    %94 = vector.load %arg4[%c0_69, %c0_70, %c96_71] : memref<1x16x128xf32, #tpu.memory_space<vmem>>, vector<1x16x32xf32>
    %95 = vector.shape_cast %94 : vector<1x16x32xf32> to vector<16x32xf32>
    %cst_72 = arith.constant dense<0.000000e+00> : vector<16x16xf32>
    %96 = tpu.matmul %91, %93, %cst_72 {dimension_numbers = #tpu.dot_dimension_numbers<[1], [1], [0], [0], [0, 0, 1, 0], [], []>} : vector<16x32xf32>, vector<16x32xf32>, vector<16x16xf32> -> vector<16x16xf32>
    %cst_73 = arith.constant -3.40282347E+38 : f32
    %97 = vector.broadcast %cst_73 : f32 to vector<16x16xf32>
    %98 = arith.select %3, %97, %96 : vector<16x16xi1>, vector<16x16xf32>
    %cst_74 = arith.constant dense<0xFF800000> : vector<16xf32>
    %99 = vector.multi_reduction <maximumf>, %98, %cst_74 [1] : vector<16x16xf32> to vector<16xf32>
    %100 = vector.shape_cast %99 : vector<16xf32> to vector<16x1xf32>
    %101 = vector.broadcast %100 : vector<16x1xf32> to vector<16x16xf32>
    %102 = arith.subf %98, %101 : vector<16x16xf32>
    %103 = math.exp %102 : vector<16x16xf32>
    %cst_75 = arith.constant dense<0.000000e+00> : vector<16xf32>
    %104 = vector.multi_reduction <add>, %103, %cst_75 [1] : vector<16x16xf32> to vector<16xf32>
    %105 = vector.shape_cast %104 : vector<16xf32> to vector<16x1xf32>
    %106 = tpu.reciprocal %105 {approx = true} : vector<16x1xf32> -> vector<16x1xf32>
    %107 = vector.broadcast %106 : vector<16x1xf32> to vector<16x16xf32>
    %108 = arith.mulf %103, %107 : vector<16x16xf32>
    %cst_76 = arith.constant dense<0.000000e+00> : vector<16x32xf32>
    %109 = tpu.matmul %108, %95, %cst_76 {dimension_numbers = #tpu.dot_dimension_numbers<[1], [0], [0], [1], [0, 0, 1, 1], [], []>} : vector<16x16xf32>, vector<16x32xf32>, vector<16x32xf32> -> vector<16x32xf32>
    %c0_77 = arith.constant 0 : index
    %c3 = arith.constant 3 : index
    %c0_78 = arith.constant 0 : index
    %c0_79 = arith.constant 0 : index
    %110 = vector.load %arg7[%c0_77, %c3, %c0_78, %c0_79] : memref<1x4x16x16xf32, #tpu.memory_space<vmem>>, vector<1x1x16x16xf32>
    %111 = vector.shape_cast %110 : vector<1x1x16x16xf32> to vector<16x16xf32>
    %112 = vector.shape_cast %108 : vector<16x16xf32> to vector<1x1x16x16xf32>
    tpu.vector_store %arg7[%c0_77, %c3, %c0_78, %c0_79], %112 {strides = array<i32>} : memref<1x4x16x16xf32, #tpu.memory_space<vmem>>, vector<1x1x16x16xf32>,
    %c0_80 = arith.constant 0 : index
    %c0_81 = arith.constant 0 : index
    %c96_82 = arith.constant 96 : index
    %113 = vector.load %arg6[%c0_80, %c0_81, %c96_82] : memref<1x16x128xf32, #tpu.memory_space<vmem>>, vector<1x16x32xf32>
    %114 = vector.shape_cast %113 : vector<1x16x32xf32> to vector<16x32xf32>
    %115 = vector.shape_cast %109 : vector<16x32xf32> to vector<1x16x32xf32>
    tpu.vector_store %arg6[%c0_80, %c0_81, %c96_82], %115 {strides = array<i32>} : memref<1x16x128xf32, #tpu.memory_space<vmem>>, vector<1x16x32xf32>,
    return
  }
  func.func @transform_0(%arg0: i32, %arg1: i32) -> (i32, i32, i32) {
    %c0_i32 = arith.constant 0 : i32
    %c0_i32_0 = arith.constant 0 : i32
    return %arg0, %arg1, %c0_i32 : i32, i32, i32
  }
  func.func @transform_1(%arg0: i32, %arg1: i32) -> (i32, i32, i32) {
    %c0_i32 = arith.constant 0 : i32
    %c0_i32_0 = arith.constant 0 : i32
    %c0_i32_1 = arith.constant 0 : i32
    return %arg0, %c0_i32, %c0_i32_0 : i32, i32, i32
  }
  func.func @transform_2(%arg0: i32, %arg1: i32) -> (i32, i32, i32) {
    %c0_i32 = arith.constant 0 : i32
    %c0_i32_0 = arith.constant 0 : i32
    %c0_i32_1 = arith.constant 0 : i32
    return %arg0, %c0_i32, %c0_i32_0 : i32, i32, i32
  }
  func.func @transform_3(%arg0: i32, %arg1: i32) -> (i32, i32, i32) {
    %c0_i32 = arith.constant 0 : i32
    %c0_i32_0 = arith.constant 0 : i32
    %c0_i32_1 = arith.constant 0 : i32
    return %c0_i32, %arg1, %c0_i32_0 : i32, i32, i32
  }
  func.func @transform_4(%arg0: i32, %arg1: i32) -> (i32, i32, i32) {
    %c0_i32 = arith.constant 0 : i32
    %c0_i32_0 = arith.constant 0 : i32
    return %arg0, %arg1, %c0_i32 : i32, i32, i32
  }
  func.func @transform_5(%arg0: i32, %arg1: i32) -> (i32, i32, i32, i32) {
    %c0_i32 = arith.constant 0 : i32
    %c0_i32_0 = arith.constant 0 : i32
    %c0_i32_1 = arith.constant 0 : i32
    return %arg0, %c0_i32, %arg1, %c0_i32_0 : i32, i32, i32, i32
  }
}

</mosaic_0001>

<llo_original>
// kernel: tpu_custom_call.1
$region0: #{tpu_custom_call.1}
  #allocation0 [shape = 'u32[]', space=smem, size = 0x4, offset = 0x4, fixed_abs, tag = 'smem constant byte address 0x4 - core index']
  #allocation1 [shape = 'u32[72,128]{1,0:T(1,128)}', space=vmem, size = 0x9000, scoped, tag = 'internal scratch']
  %s0 = inlined_call_operand.hbm [shape: f32[2,16,128], index: 0, kind: input, shape index: {}]
  %s1 = inlined_call_operand.hbm [shape: f32[2,16,128], index: 1, kind: input, shape index: {}]
  %s2 = inlined_call_operand.hbm [shape: f32[2,16,128], index: 2, kind: input, shape index: {}]
  %s3 = inlined_call_operand.hbm [shape: s8[1,16,16], index: 3, kind: input, shape index: {}]
  %s4 = inlined_call_operand.hbm [shape: f32[2,16,128], index: 4, kind: output, shape index: {0}]
  %s5 = inlined_call_operand.hbm [shape: f32[2,4,16,16], index: 5, kind: output, shape index: {1}]
  %6 = xla_tuple %s4, %s5
  %s7 = sld [smem:[#allocation0]]
  $region73: #{tpu_custom_call.1} parent=0
    _
  %s9 = ssub.s32 1, %s7
  %s10 = scalar_select 0, %s9, %s7
  $region1: #{tpu_custom_call.1} parent=0
    #allocation2 [shape = 'u8[16384]{0}', space=vmem, size = 0x4000, scoped, tag = 'input window, operand 0']
    #allocation3 [shape = 's32[2]{0}', space=sflag, size = 0x8, scoped, tag = 'scoped memory for tpu_custom_call.1']
    #allocation4 [shape = 's32[2]{0}', space=sflag, size = 0x8, scoped, tag = 'scoped memory for tpu_custom_call.1']
    #allocation5 [shape = 'u8[16384]{0}', space=vmem, size = 0x4000, scoped, tag = 'input window, operand 1']
    #allocation6 [shape = 's32[2]{0}', space=sflag, size = 0x8, scoped, tag = 'scoped memory for tpu_custom_call.1']
    #allocation7 [shape = 'u8[16384]{0}', space=vmem, size = 0x4000, scoped, tag = 'input window, operand 2']
    #allocation8 [shape = 'u8[2048]{0}', space=vmem, size = 0x800, scoped, tag = 'input window, operand 3, single buffered']
    #allocation9 [shape = 's32[1]{0}', space=sflag, size = 0x4, scoped, tag = 'scoped memory for tpu_custom_call.1']
    #allocation10 [shape = 'u8[16384]{0}', space=vmem, size = 0x4000, scoped, tag = 'output window, operand 0']
    #allocation11 [shape = 'u8[65536]{0}', space=vmem, size = 0x10000, scoped, tag = 'output window, operand 1']
    #allocation12 [shape = 's32[2]{0}', space=sflag, size = 0x8, scoped, tag = 'scoped memory for tpu_custom_call.1']
    %11 = vsyncpa [#allocation3], 0
    %s12 = scalar_lea.sflag [#allocation3], 1
    %13 = vsyncpa %s12, 0
    %14 = vsyncpa [#allocation6], 0
    %s15 = scalar_lea.sflag [#allocation6], 1
    %16 = vsyncpa %s15, 0
    %17 = vsyncpa [#allocation9], 0
    %18 = vsyncpa [#allocation4], 0
    %s19 = scalar_lea.sflag [#allocation4], 1
    %20 = vsyncpa %s19, 0
    %21 = vsyncpa [#allocation12], 0
    %s22 = scalar_lea.sflag [#allocation12], 1
    %23 = vsyncpa %s22, 0
    loop: start=0, step=1, limit=4
    $region2: #{tpu_custom_call.1} parent=1 // loop_pre_header
      _
    $region3: #{tpu_custom_call.1} parent=1 // loop_header
      %s25 = sphi 0, %s29
      %p26 = scmp.ge.s32.totalorder %s25, 4
      %s32 = sphi 0, %s44
      %s33 = sphi 0, %s40
      %s34 = sphi 0, %s32
      %s35 = sphi 0, %s33
      %s36 = sphi 0, %s34
      %s37 = sphi 0, %s35
      %s49 = sphi 0, %s51
      %s52 = sphi 0, %s49
      %s53 = sphi 0, %s52
      %s69 = sphi 0, %s53
      %s75 = sphi 0, %s77
      %s78 = sphi 0, %s75
      %s79 = sphi 0, %s78
      %s95 = sphi 0, %s79
      %s101 = sphi 0, %s103
      %s104 = sphi 0, %s101
      %s105 = sphi 0, %s104
      %s121 = sphi 0, %s105
      %s127 = sphi 0, %s129
      %s130 = sphi 0, %s127
      %s131 = sphi 0, %s130
      %s147 = sphi 0, %s131
      %s155 = sphi 0, %s157
      %s158 = sphi 0, %s155
      %s159 = sphi 0, %s158
      %s175 = sphi 0, %s159
      %s183 = sphi 0, %s185
      %s186 = sphi 0, %s183
      %s187 = sphi 0, %s186
      %s203 = sphi 0, %s187
    $region4: #{tpu_custom_call.1} parent=1 // loop_header_branch
      %28 = sbr.rel (%p26) target = $region8
    $region5: #{tpu_custom_call.1} parent=1 // loop_body
      %s30 = ssub.s32 %s25, 1
      %s31 = ssub.s32 %s25, 2
      %s38 = sadd.s32 1, %s33
      %p39 = scmp.ge.s32.totalorder %s38, 1
      %s40 = scalar_select %p39, 0, %s38
      %s41 = sadd.s32 1, %s32
      %s42 = scalar_select %p39, %s41, %s32
      %p43 = scmp.ge.s32.totalorder %s42, 2
      %s44 = scalar_select %p43, 0, %s42
      %s45 = ssub.s32 %s32, %s44
      %s46 = ssub.s32 %s33, %s40
      %s47 = sor.u32 %s45, %s46
      %p48 = scmp.eq.s32.totalorder %s47, 0
      %s50 = sadd.s32 %s49, 1
      %s51 = scalar_select %p48, %s49, %s50
      %p54 = pneg %p48
      %p55 = scmp.eq.s32.totalorder %s25, 1
      %p56 = por %p54, %p55
      %p57 = scmp.ne.s32.totalorder %s49, %s52
      %p58 = scmp.eq.s32.totalorder %s25, 0
      %p59 = por %p57, %p58
      %p60 = scmp.ne.s32.totalorder %s49, %s52
      %p61 = scmp.eq.s32.totalorder %s30, 1
      %p62 = por %p60, %p61
      %p63 = scmp.ne.s32.totalorder %s52, %s53
      %p64 = scmp.eq.s32.totalorder %s30, 0
      %p65 = por %p63, %p64
      %p66 = scmp.ne.s32.totalorder %s52, %s53
      %p67 = scmp.eq.s32.totalorder %s31, 1
      %p68 = por %p66, %p67
      %p70 = scmp.ne.s32.totalorder %s53, %s69
      %p71 = scmp.eq.s32.totalorder %s31, 0
      %p72 = por %p70, %p71
      %s73 = ssub.s32 %s32, %s44
      %p74 = scmp.eq.s32.totalorder %s73, 0
      %s76 = sadd.s32 %s75, 1
      %s77 = scalar_select %p74, %s75, %s76
      %p80 = pneg %p74
      %p81 = scmp.eq.s32.totalorder %s25, 1
      %p82 = por %p80, %p81
      %p83 = scmp.ne.s32.totalorder %s75, %s78
      %p84 = scmp.eq.s32.totalorder %s25, 0
      %p85 = por %p83, %p84
      %p86 = scmp.ne.s32.totalorder %s75, %s78
      %p87 = scmp.eq.s32.totalorder %s30, 1
      %p88 = por %p86, %p87
      %p89 = scmp.ne.s32.totalorder %s78, %s79
      %p90 = scmp.eq.s32.totalorder %s30, 0
      %p91 = por %p89, %p90
      %p92 = scmp.ne.s32.totalorder %s78, %s79
      %p93 = scmp.eq.s32.totalorder %s31, 1
      %p94 = por %p92, %p93
      %p96 = scmp.ne.s32.totalorder %s79, %s95
      %p97 = scmp.eq.s32.totalorder %s31, 0
      %p98 = por %p96, %p97
      %s99 = ssub.s32 %s32, %s44
      %p100 = scmp.eq.s32.totalorder %s99, 0
      %s102 = sadd.s32 %s101, 1
      %s103 = scalar_select %p100, %s101, %s102
      %p106 = pneg %p100
      %p107 = scmp.eq.s32.totalorder %s25, 1
      %p108 = por %p106, %p107
      %p109 = scmp.ne.s32.totalorder %s101, %s104
      %p110 = scmp.eq.s32.totalorder %s25, 0
      %p111 = por %p109, %p110
      %p112 = scmp.ne.s32.totalorder %s101, %s104
      %p113 = scmp.eq.s32.totalorder %s30, 1
      %p114 = por %p112, %p113
      %p115 = scmp.ne.s32.totalorder %s104, %s105
      %p116 = scmp.eq.s32.totalorder %s30, 0
      %p117 = por %p115, %p116
      %p118 = scmp.ne.s32.totalorder %s104, %s105
      %p119 = scmp.eq.s32.totalorder %s31, 1
      %p120 = por %p118, %p119
      %p122 = scmp.ne.s32.totalorder %s105, %s121
      %p123 = scmp.eq.s32.totalorder %s31, 0
      %p124 = por %p122, %p123
      %s125 = ssub.s32 %s33, %s40
      %p126 = scmp.eq.s32.totalorder %s125, 0
      %s128 = sadd.s32 %s127, 1
      %s129 = scalar_select %p126, %s127, %s128
      %p132 = pneg %p126
      %p133 = scmp.eq.s32.totalorder %s25, 1
      %p134 = por %p132, %p133
      %p135 = scmp.ne.s32.totalorder %s127, %s130
      %p136 = scmp.eq.s32.totalorder %s25, 0
      %p137 = por %p135, %p136
      %p138 = scmp.ne.s32.totalorder %s127, %s130
      %p139 = scmp.eq.s32.totalorder %s30, 1
      %p140 = por %p138, %p139
      %p141 = scmp.ne.s32.totalorder %s130, %s131
      %p142 = scmp.eq.s32.totalorder %s30, 0
      %p143 = por %p141, %p142
      %p144 = scmp.ne.s32.totalorder %s130, %s131
      %p145 = scmp.eq.s32.totalorder %s31, 1
      %p146 = por %p144, %p145
      %p148 = scmp.ne.s32.totalorder %s131, %s147
      %p149 = scmp.eq.s32.totalorder %s31, 0
      %p150 = por %p148, %p149
      %s151 = ssub.s32 %s32, %s44
      %s152 = ssub.s32 %s33, %s40
      %s153 = sor.u32 %s151, %s152
      %p154 = scmp.eq.s32.totalorder %s153, 0
      %s156 = sadd.s32 %s155, 1
      %s157 = scalar_select %p154, %s155, %s156
      %p160 = pneg %p154
      %p161 = scmp.eq.s32.totalorder %s25, 1
      %p162 = por %p160, %p161
      %p163 = scmp.ne.s32.totalorder %s155, %s158
      %p164 = scmp.eq.s32.totalorder %s25, 0
      %p165 = por %p163, %p164
      %p166 = scmp.ne.s32.totalorder %s155, %s158
      %p167 = scmp.eq.s32.totalorder %s30, 1
      %p168 = por %p166, %p167
      %p169 = scmp.ne.s32.totalorder %s158, %s159
      %p170 = scmp.eq.s32.totalorder %s30, 0
      %p171 = por %p169, %p170
      %p172 = scmp.ne.s32.totalorder %s158, %s159
      %p173 = scmp.eq.s32.totalorder %s31, 1
      %p174 = por %p172, %p173
      %p176 = scmp.ne.s32.totalorder %s159, %s175
      %p177 = scmp.eq.s32.totalorder %s31, 0
      %p178 = por %p176, %p177
      %s179 = ssub.s32 %s32, %s44
      %s180 = ssub.s32 %s33, %s40
      %s181 = sor.u32 %s179, %s180
      %p182 = scmp.eq.s32.totalorder %s181, 0
      %s184 = sadd.s32 %s183, 1
      %s185 = scalar_select %p182, %s183, %s184
      %p188 = pneg %p182
      %p189 = scmp.eq.s32.totalorder %s25, 1
      %p190 = por %p188, %p189
      %p191 = scmp.ne.s32.totalorder %s183, %s186
      %p192 = scmp.eq.s32.totalorder %s25, 0
      %p193 = por %p191, %p192
      %p194 = scmp.ne.s32.totalorder %s183, %s186
      %p195 = scmp.eq.s32.totalorder %s30, 1
      %p196 = por %p194, %p195
      %p197 = scmp.ne.s32.totalorder %s186, %s187
      %p198 = scmp.eq.s32.totalorder %s30, 0
      %p199 = por %p197, %p198
      %p200 = scmp.ne.s32.totalorder %s186, %s187
      %p201 = scmp.eq.s32.totalorder %s31, 1
      %p202 = por %p200, %p201
      %p204 = scmp.ne.s32.totalorder %s187, %s203
      %p205 = scmp.eq.s32.totalorder %s31, 0
      %p206 = por %p204, %p205
      %p207 = scmp.le.s32.totalorder 1, %s25
      %p208 = scmp.lt.s32.totalorder %s25, 3
      %p209 = pnand %p207, %p208
      %p210 = pneg %p209
      // Predicated region
      $region9: #{tpu_custom_call.1} parent=5 // pred_check
        _
      $region10: #{tpu_custom_call.1} parent=5 // pred_check_branch
        %212 = sbr.rel (%p209) target = $region12
      $region11: #{tpu_custom_call.1} parent=5 // pred_region
        %s213 = ssub.s32 %s25, 1
        // Predicated region
        $region13: #{tpu_custom_call.1} parent=11 // pred_check
          %p214 = pneg %p143
        $region14: #{tpu_custom_call.1} parent=11 // pred_check_branch
          %216 = sbr.rel (%p214) target = $region16
        $region15: #{tpu_custom_call.1} parent=11 // pred_region
          %s217 = smul.u32 2, %s35
          %219 = vsyncadd [#allocation9], 0
          %s220 = smul.addr %s217, 2
          %s221 = scalar_lea.hbm %s3, %s220
          %s222 = sshll.u32 %s221, 4
          %s223 = int_to_ptr.hbm [resolvable:$true] %s222
          %s224 = sshll.u32 [#allocation8], 4
          %s225 = int_to_ptr.vmem [resolvable:$true] %s224
          %230 = dma.hbm_to_vmem [thread:$0]  %s223, 64, %s225, [#allocation9], 32, 32, 2
        $region16: #{tpu_custom_call.1} parent=11 // pred_fallthru
          _
      $region12: #{tpu_custom_call.1} parent=5 // pred_fallthru
        _
      %p231 = scmp.lt.s32.totalorder %s25, 2
      // Predicated region
      $region17: #{tpu_custom_call.1} parent=5 // pred_check
        %p232 = pneg %p231
      $region18: #{tpu_custom_call.1} parent=5 // pred_check_branch
        %234 = sbr.rel (%p232) target = $region20
      $region19: #{tpu_custom_call.1} parent=5 // pred_region
        // Predicated region
        $region21: #{tpu_custom_call.1} parent=19 // pred_check
          %p235 = pneg %p59
        $region22: #{tpu_custom_call.1} parent=19 // pred_check_branch
          %237 = sbr.rel (%p235) target = $region24
        $region23: #{tpu_custom_call.1} parent=19 // pred_region
          %s238 = sand.u32 %s49, 1
          %s239 = scalar_lea.sflag [#allocation3], %s238
          %s240 = sand.u32 %s49, 1
          %s241 = smul.addr %s240, 16
          %s242 = scalar_lea.vmem [#allocation2], %s241
          %s243 = smul.u32 2, %s33
          %245 = vsyncadd %s239, 0
          %s246 = smul.addr %s32, 2
          %s247 = sadd.s32 %s243, %s246
          %s248 = smul.addr %s247, 8
          %s249 = scalar_lea.hbm %s0, %s248
          %s250 = sshll.u32 %s249, 4
          %s251 = int_to_ptr.hbm [resolvable:$true] %s250
          %s252 = sshll.u32 %s242, 4
          %s253 = int_to_ptr.vmem [resolvable:$true] %s252
          %258 = dma.hbm_to_vmem [thread:$0]  %s251, 256, %s253, %s239, 128, 128, 8
        $region24: #{tpu_custom_call.1} parent=19 // pred_fallthru
          _
        // Predicated region
        $region25: #{tpu_custom_call.1} parent=19 // pred_check
          %p259 = pneg %p85
        $region26: #{tpu_custom_call.1} parent=19 // pred_check_branch
          %261 = sbr.rel (%p259) target = $region28
        $region27: #{tpu_custom_call.1} parent=19 // pred_region
          %s262 = sand.u32 %s25, 1
          %s263 = scalar_lea.sflag [#allocation6], %s262
          %s264 = sand.u32 %s75, 1
          %s265 = smul.addr %s264, 16
          %s266 = scalar_lea.vmem [#allocation5], %s265
          %268 = vsyncadd %s263, 0
          %s269 = smul.addr %s32, 2
          %s270 = smul.addr %s269, 8
          %s271 = scalar_lea.hbm %s1, %s270
          %s272 = sshll.u32 %s271, 4
          %s273 = int_to_ptr.hbm [resolvable:$true] %s272
          %s274 = sshll.u32 %s266, 4
          %s275 = int_to_ptr.vmem [resolvable:$true] %s274
          %280 = dma.hbm_to_vmem [thread:$0]  %s273, 256, %s275, %s263, 128, 128, 8
        $region28: #{tpu_custom_call.1} parent=19 // pred_fallthru
          _
        // Predicated region
        $region29: #{tpu_custom_call.1} parent=19 // pred_check
          %p281 = pneg %p111
        $region30: #{tpu_custom_call.1} parent=19 // pred_check_branch
          %283 = sbr.rel (%p281) target = $region32
        $region31: #{tpu_custom_call.1} parent=19 // pred_region
          %s284 = sand.u32 %s25, 1
          %s285 = scalar_lea.sflag [#allocation6], %s284
          %s286 = sand.u32 %s101, 1
          %s287 = smul.addr %s286, 16
          %s288 = scalar_lea.vmem [#allocation7], %s287
          %290 = vsyncadd %s285, 0
          %s291 = smul.addr %s32, 2
          %s292 = smul.addr %s291, 8
          %s293 = scalar_lea.hbm %s2, %s292
          %s294 = sshll.u32 %s293, 4
          %s295 = int_to_ptr.hbm [resolvable:$true] %s294
          %s296 = sshll.u32 %s288, 4
          %s297 = int_to_ptr.vmem [resolvable:$true] %s296
          %302 = dma.hbm_to_vmem [thread:$0]  %s295, 256, %s297, %s285, 128, 128, 8
        $region32: #{tpu_custom_call.1} parent=19 // pred_fallthru
          _
      $region20: #{tpu_custom_call.1} parent=5 // pred_fallthru
        _
      %p303 = scmp.le.s32.totalorder 1, %s25
      %p304 = scmp.lt.s32.totalorder %s25, 3
      %p305 = pnand %p303, %p304
      %p306 = pneg %p305
      // Predicated region
      $region33: #{tpu_custom_call.1} parent=5 // pred_check
        _
      $region34: #{tpu_custom_call.1} parent=5 // pred_check_branch
        %308 = sbr.rel (%p305) target = $region36
      $region35: #{tpu_custom_call.1} parent=5 // pred_region
        %s309 = ssub.s32 %s25, 1
        %s310 = sand.u32 %s52, 1
        %s311 = scalar_lea.sflag [#allocation3], %s310
        %s312 = sand.u32 %s52, 1
        %s313 = smul.addr %s312, 16
        %s314 = scalar_lea.vmem [#allocation2], %s313
        // Predicated region
        $region37: #{tpu_custom_call.1} parent=35 // pred_check
          %p315 = pneg %p65
        $region38: #{tpu_custom_call.1} parent=35 // pred_check_branch
          %317 = sbr.rel (%p315) target = $region40
        $region39: #{tpu_custom_call.1} parent=35 // pred_region
          %319 = dma.done %s311, 256
        $region40: #{tpu_custom_call.1} parent=35 // pred_fallthru
          _
        %s320 = sand.u32 %s30, 1
        %s321 = scalar_lea.sflag [#allocation6], %s320
        %s322 = sand.u32 %s78, 1
        %s323 = smul.addr %s322, 16
        %s324 = scalar_lea.vmem [#allocation5], %s323
        // Predicated region
        $region41: #{tpu_custom_call.1} parent=35 // pred_check
          %p325 = pneg %p91
        $region42: #{tpu_custom_call.1} parent=35 // pred_check_branch
          %327 = sbr.rel (%p325) target = $region44
        $region43: #{tpu_custom_call.1} parent=35 // pred_region
          %329 = dma.done %s321, 256
        $region44: #{tpu_custom_call.1} parent=35 // pred_fallthru
          _
        %s330 = sand.u32 %s30, 1
        %s331 = scalar_lea.sflag [#allocation6], %s330
        %s332 = sand.u32 %s104, 1
        %s333 = smul.addr %s332, 16
        %s334 = scalar_lea.vmem [#allocation7], %s333
        // Predicated region
        $region45: #{tpu_custom_call.1} parent=35 // pred_check
          %p335 = pneg %p117
        $region46: #{tpu_custom_call.1} parent=35 // pred_check_branch
          %337 = sbr.rel (%p335) target = $region48
        $region47: #{tpu_custom_call.1} parent=35 // pred_region
          %339 = dma.done %s331, 256
        $region48: #{tpu_custom_call.1} parent=35 // pred_fallthru
          _
        // Predicated region
        $region49: #{tpu_custom_call.1} parent=35 // pred_check
          %p340 = pneg %p143
        $region50: #{tpu_custom_call.1} parent=35 // pred_check_branch
          %342 = sbr.rel (%p340) target = $region52
        $region51: #{tpu_custom_call.1} parent=35 // pred_region
          %344 = dma.done [#allocation9], 64
        $region52: #{tpu_custom_call.1} parent=35 // pred_fallthru
          _
        %s345 = sand.u32 %s52, 1
        %s346 = scalar_lea.sflag [#allocation3], %s345
        %s347 = sand.u32 %s52, 1
        %s348 = smul.addr %s347, 16
        %s349 = scalar_lea.vmem [#allocation2], %s348
        %p350 = pneg %p65
        %p351 = pneg %p62
        %s352 = sand.u32 %s30, 1
        %s353 = scalar_lea.sflag [#allocation6], %s352
        %s354 = sand.u32 %s78, 1
        %s355 = smul.addr %s354, 16
        %s356 = scalar_lea.vmem [#allocation5], %s355
        %p357 = pneg %p91
        %p358 = pneg %p88
        %s359 = sand.u32 %s30, 1
        %s360 = scalar_lea.sflag [#allocation6], %s359
        %s361 = sand.u32 %s104, 1
        %s362 = smul.addr %s361, 16
        %s363 = scalar_lea.vmem [#allocation7], %s362
        %p364 = pneg %p117
        %p365 = pneg %p114
        %p366 = pneg %p143
        %p367 = pneg %p140
        %p368 = pneg %p171
        %p369 = pneg %p168
        %s370 = sand.u32 %s158, 1
        %s371 = scalar_lea.sflag [#allocation4], %s370
        %s372 = sand.u32 %s158, 1
        %s373 = smul.addr %s372, 16
        %s374 = scalar_lea.vmem [#allocation10], %s373
        %p375 = pneg %p199
        %p376 = pneg %p196
        %s377 = sand.u32 %s186, 1
        %s378 = scalar_lea.sflag [#allocation12], %s377
        %s379 = sand.u32 %s186, 1
        %s380 = smul.addr %s379, 64
        %s381 = scalar_lea.vmem [#allocation11], %s380
        %s382 = smul.u32 2, %s35
        %s383 = smul.u32 2, %s35
        %s384 = smul.u32 2, %s35
        %s385 = smul.u32 2, %s35
        %v388 = vld [vmem:[#allocation8] sm:$0x3]
        %v389 = vld [vmem:[#allocation8 + $0x2] sm:$0x3]
        %vm390 = vnez %v388
        %vm391 = vnez %v389
        %v392 = vld [vmem:[%s314] sm:$0xff]
        %v393 = vld [vmem:[%s314 + $0x8] sm:$0xff]
        %v394 = vmul.f32 %v392, 0.17677669
        %v395 = vmul.f32 %v393, 0.17677669
        %v396 = vld [vmem:[%s324] sm:$0xff]
        %v397 = vld [vmem:[%s324 + $0x8] sm:$0xff]
        %v398 = vld [vmem:[%s334] sm:$0xff]
        %v399 = vld [vmem:[%s334 + $0x8] sm:$0xff]
        %vm400 = vcmask 261120
        %v402 = vsel %vm400, %v394, 0
        %v405 = vsel %vm400, %v395, 0
        %v408 = vsel %vm400, %v396, 0
        %v411 = vsel %vm400, %v397, 0
        %413 = vmatpush.xpose.msra.mxu0 0.0
        %414 = vmatpush.xpose.msra.mxu0 0.0
        %415 = vmatpush.xpose.msra.mxu0 0.0
        %416 = vmatpush.xpose.msra.mxu0 0.0
        %417 = vmatpush.xpose.msra.mxu0 0.0
        %418 = vmatpush.xpose.msra.mxu0 0.0
        %419 = vmatpush.xpose.msra.mxu0 0.0
        %420 = vmatpush.xpose.msra.mxu0 0.0
        %421 = vmatpush.xpose.msra.mxu0 0.0
        %422 = vmatpush.xpose.msra.mxu0 0.0
        %423 = vmatpush.xpose.msra.mxu0 0.0
        %424 = vmatpush.xpose.msra.mxu0 0.0
        %425 = vmatpush.xpose.msra.mxu0 0.0
        %426 = vmatpush.xpose.msra.mxu0 0.0
        %427 = vmatpush.xpose.msra.mxu0 %v411
        %428 = vmatpush.xpose.msra.mxu0 %v408
        %429 = vmatmul.f32.gmra.mxu0 %v402
        %v430 = vpop.f32.mrf.mxu0
        %v431 = vadd.f32 0.0, %v430
        %432 = vmatmul.f32.gmra.mxu0 %v405
        %v433 = vpop.f32.mrf.mxu0
        %v434 = vadd.f32 0.0, %v433
        %435 = vdwg.mxu0
        %v436 = vsel %vm390, 16843009, 0
        %v437 = vsel %vm391, 16843009, 0
        %v438 = vunpack.c.0.s8 %v436
        %v439 = vunpack.c.0.s8 %v437
        %vm440 = vcmp.ne.s32.totalorder %v438, 0
        %vm441 = vcmp.ne.s32.totalorder %v439, 0
        %v442 = vsel %vm440, -3.4028235e+38, %v431
        %v443 = vsel %vm441, -3.4028235e+38, %v434
        %vm444 = vcmask 130048
        %v445 = vsel %vm444, %v442, -inf
        %446 = vmax.xlane.f32.xlu0 %v445
        %v447 = vpop.xlane.xlu0 %446
        %v448 = vsel %vm444, %v443, -inf
        %449 = vmax.xlane.f32.xlu0 %v448
        %v450 = vpop.xlane.xlu0 %449
        %v451 = vsub.f32 %v442, %v447
        %v452 = vsub.f32 %v443, %v450
        %v453 = vmul.f32 %v451, 1.442695
        %v454 = vpow.pop %v453
        %v455 = vmul.f32 %v452, 1.442695
        %v456 = vpow.pop %v455
        %v457 = vsel %vm444, %v454, 0.0
        %458 = vadd.xlane.f32.xlu0 %v457
        %v459 = vpop.xlane.xlu0 %458
        %v460 = vsel %vm444, %v456, 0.0
        %461 = vadd.xlane.f32.xlu0 %v460
        %v462 = vpop.xlane.xlu0 %461
        %v463 = vrcp.pop %v459
        %v464 = vrcp.pop %v462
        %v465 = vmul.f32 %v454, %v463
        %v466 = vmul.f32 %v456, %v464
        %v468 = vsel %vm444, %v465, 0
        %v471 = vsel %vm444, %v466, 0
        %473 = vmatpush.msra.mxu0 0.0
        %474 = vmatpush.msra.mxu0 0.0
        %475 = vmatpush.msra.mxu0 0.0
        %476 = vmatpush.msra.mxu0 0.0
        %477 = vmatpush.msra.mxu0 0.0
        %478 = vmatpush.msra.mxu0 0.0
        %479 = vmatpush.msra.mxu0 0.0
        %480 = vmatpush.msra.mxu0 0.0
        %481 = vmatpush.msra.mxu0 0.0
        %482 = vmatpush.msra.mxu0 0.0
        %483 = vmatpush.msra.mxu0 0.0
        %484 = vmatpush.msra.mxu0 0.0
        %485 = vmatpush.msra.mxu0 0.0
        %486 = vmatpush.msra.mxu0 0.0
        %487 = vmatpush.msra.mxu0 %v399
        %488 = vmatpush.msra.mxu0 %v398
        %489 = vmatmul.f32.gmra.mxu0 %v468
        %v490 = vpop.f32.mrf.mxu0
        %v491 = vadd.f32 0.0, %v490
        %492 = vmatmul.f32.gmra.mxu0 %v471
        %v493 = vpop.f32.mrf.mxu0
        %v494 = vadd.f32 0.0, %v493
        %495 = vdwg.mxu0
        %496 = vst.msk [vmem:[%s381] sm:$0xff] %vm444, %v465
        %497 = vst.msk [vmem:[%s381 + $0x8] sm:$0xff] %vm444, %v466
        %498 = vst.msk [vmem:[%s374] sm:$0xff] %vm400, %v491
        %499 = vst.msk [vmem:[%s374 + $0x8] sm:$0xff] %vm400, %v494
        %v500 = vld [vmem:[%s314] sm:$0xff]
        %v501 = vld [vmem:[%s314 + $0x8] sm:$0xff]
        %v502 = vmul.f32 %v500, 0.17677669
        %v503 = vmul.f32 %v501, 0.17677669
        %v504 = vld [vmem:[%s324] sm:$0xff]
        %v505 = vld [vmem:[%s324 + $0x8] sm:$0xff]
        %v506 = vld [vmem:[%s334] sm:$0xff]
        %v507 = vld [vmem:[%s334 + $0x8] sm:$0xff]
        %510 = vrot.lane.b32.xlu0 %v502, 96
        %v511 = vpop.permute.xlu0 %510
        %512 = vrot.lane.b32.xlu0 %v503, 96
        %v513 = vpop.permute.xlu0 %512
        %516 = vrot.lane.b32.xlu0 %v504, 96
        %v517 = vpop.permute.xlu0 %516
        %518 = vrot.lane.b32.xlu0 %v505, 96
        %v519 = vpop.permute.xlu0 %518
        %v520 = vsel %vm400, %v511, 0
        %v522 = vsel %vm400, %v513, 0
        %v524 = vsel %vm400, %v517, 0
        %v526 = vsel %vm400, %v519, 0
        %528 = vmatpush.xpose.msra.mxu0 0.0
        %529 = vmatpush.xpose.msra.mxu0 0.0
        %530 = vmatpush.xpose.msra.mxu0 0.0
        %531 = vmatpush.xpose.msra.mxu0 0.0
        %532 = vmatpush.xpose.msra.mxu0 0.0
        %533 = vmatpush.xpose.msra.mxu0 0.0
        %534 = vmatpush.xpose.msra.mxu0 0.0
        %535 = vmatpush.xpose.msra.mxu0 0.0
        %536 = vmatpush.xpose.msra.mxu0 0.0
        %537 = vmatpush.xpose.msra.mxu0 0.0
        %538 = vmatpush.xpose.msra.mxu0 0.0
        %539 = vmatpush.xpose.msra.mxu0 0.0
        %540 = vmatpush.xpose.msra.mxu0 0.0
        %541 = vmatpush.xpose.msra.mxu0 0.0
        %542 = vmatpush.xpose.msra.mxu0 %v526
        %543 = vmatpush.xpose.msra.mxu0 %v524
        %544 = vmatmul.f32.gmra.mxu0 %v520
        %v545 = vpop.f32.mrf.mxu0
        %v546 = vadd.f32 0.0, %v545
        %547 = vmatmul.f32.gmra.mxu0 %v522
        %v548 = vpop.f32.mrf.mxu0
        %v549 = vadd.f32 0.0, %v548
        %550 = vdwg.mxu0
        %v551 = vsel %vm440, -3.4028235e+38, %v546
        %v552 = vsel %vm441, -3.4028235e+38, %v549
        %v553 = vsel %vm444, %v551, -inf
        %554 = vmax.xlane.f32.xlu0 %v553
        %v555 = vpop.xlane.xlu0 %554
        %v556 = vsel %vm444, %v552, -inf
        %557 = vmax.xlane.f32.xlu0 %v556
        %v558 = vpop.xlane.xlu0 %557
        %v559 = vsub.f32 %v551, %v555
        %v560 = vsub.f32 %v552, %v558
        %v561 = vmul.f32 %v559, 1.442695
        %v562 = vpow.pop %v561
        %v563 = vmul.f32 %v560, 1.442695
        %v564 = vpow.pop %v563
        %v565 = vsel %vm444, %v562, 0.0
        %566 = vadd.xlane.f32.xlu0 %v565
        %v567 = vpop.xlane.xlu0 %566
        %v568 = vsel %vm444, %v564, 0.0
        %569 = vadd.xlane.f32.xlu0 %v568
        %v570 = vpop.xlane.xlu0 %569
        %v571 = vrcp.pop %v567
        %v572 = vrcp.pop %v570
        %v573 = vmul.f32 %v562, %v571
        %v574 = vmul.f32 %v564, %v572
        %577 = vrot.lane.b32.xlu0 %v506, 96
        %v578 = vpop.permute.xlu0 %577
        %579 = vrot.lane.b32.xlu0 %v507, 96
        %v580 = vpop.permute.xlu0 %579
        %v584 = vsel %vm444, %v573, 0
        %v587 = vsel %vm444, %v574, 0
        %589 = vmatpush.msra.mxu0 0.0
        %590 = vmatpush.msra.mxu0 0.0
        %591 = vmatpush.msra.mxu0 0.0
        %592 = vmatpush.msra.mxu0 0.0
        %593 = vmatpush.msra.mxu0 0.0
        %594 = vmatpush.msra.mxu0 0.0
        %595 = vmatpush.msra.mxu0 0.0
        %596 = vmatpush.msra.mxu0 0.0
        %597 = vmatpush.msra.mxu0 0.0
        %598 = vmatpush.msra.mxu0 0.0
        %599 = vmatpush.msra.mxu0 0.0
        %600 = vmatpush.msra.mxu0 0.0
        %601 = vmatpush.msra.mxu0 0.0
        %602 = vmatpush.msra.mxu0 0.0
        %603 = vmatpush.msra.mxu0 %v580
        %604 = vmatpush.msra.mxu0 %v578
        %605 = vmatmul.f32.gmra.mxu0 %v584
        %v606 = vpop.f32.mrf.mxu0
        %v607 = vadd.f32 0.0, %v606
        %608 = vmatmul.f32.gmra.mxu0 %v587
        %v609 = vpop.f32.mrf.mxu0
        %v610 = vadd.f32 0.0, %v609
        %611 = vdwg.mxu0
        %s612 = scalar_lea.vmem %s381, 16 [#allocation11]
        %613 = vst.msk [vmem:[%s612] sm:$0xff] %vm444, %v573
        %614 = vst.msk [vmem:[%s612 + $0x8] sm:$0xff] %vm444, %v574
        %617 = vrot.lane.b32.xlu0 %v607, 32
        %v618 = vpop.permute.xlu0 %617
        %619 = vrot.lane.b32.xlu0 %v610, 32
        %v620 = vpop.permute.xlu0 %619
        %vm623 = vcmask 523520
        %624 = vst.msk [vmem:[%s374] sm:$0xff] %vm623, %v618
        %625 = vst.msk [vmem:[%s374 + $0x8] sm:$0xff] %vm623, %v620
        %v626 = vld [vmem:[%s314] sm:$0xff]
        %v627 = vld [vmem:[%s314 + $0x8] sm:$0xff]
        %v628 = vmul.f32 %v626, 0.17677669
        %v629 = vmul.f32 %v627, 0.17677669
        %v630 = vld [vmem:[%s324] sm:$0xff]
        %v631 = vld [vmem:[%s324 + $0x8] sm:$0xff]
        %v632 = vld [vmem:[%s334] sm:$0xff]
        %v633 = vld [vmem:[%s334 + $0x8] sm:$0xff]
        %636 = vrot.lane.b32.xlu0 %v628, 64
        %v637 = vpop.permute.xlu0 %636
        %638 = vrot.lane.b32.xlu0 %v629, 64
        %v639 = vpop.permute.xlu0 %638
        %642 = vrot.lane.b32.xlu0 %v630, 64
        %v643 = vpop.permute.xlu0 %642
        %644 = vrot.lane.b32.xlu0 %v631, 64
        %v645 = vpop.permute.xlu0 %644
        %v646 = vsel %vm400, %v637, 0
        %v648 = vsel %vm400, %v639, 0
        %v650 = vsel %vm400, %v643, 0
        %v652 = vsel %vm400, %v645, 0
        %654 = vmatpush.xpose.msra.mxu0 0.0
        %655 = vmatpush.xpose.msra.mxu0 0.0
        %656 = vmatpush.xpose.msra.mxu0 0.0
        %657 = vmatpush.xpose.msra.mxu0 0.0
        %658 = vmatpush.xpose.msra.mxu0 0.0
        %659 = vmatpush.xpose.msra.mxu0 0.0
        %660 = vmatpush.xpose.msra.mxu0 0.0
        %661 = vmatpush.xpose.msra.mxu0 0.0
        %662 = vmatpush.xpose.msra.mxu0 0.0
        %663 = vmatpush.xpose.msra.mxu0 0.0
        %664 = vmatpush.xpose.msra.mxu0 0.0
        %665 = vmatpush.xpose.msra.mxu0 0.0
        %666 = vmatpush.xpose.msra.mxu0 0.0
        %667 = vmatpush.xpose.msra.mxu0 0.0
        %668 = vmatpush.xpose.msra.mxu0 %v652
        %669 = vmatpush.xpose.msra.mxu0 %v650
        %670 = vmatmul.f32.gmra.mxu0 %v646
        %v671 = vpop.f32.mrf.mxu0
        %v672 = vadd.f32 0.0, %v671
        %673 = vmatmul.f32.gmra.mxu0 %v648
        %v674 = vpop.f32.mrf.mxu0
        %v675 = vadd.f32 0.0, %v674
        %676 = vdwg.mxu0
        %v677 = vsel %vm440, -3.4028235e+38, %v672
        %v678 = vsel %vm441, -3.4028235e+38, %v675
        %v679 = vsel %vm444, %v677, -inf
        %680 = vmax.xlane.f32.xlu0 %v679
        %v681 = vpop.xlane.xlu0 %680
        %v682 = vsel %vm444, %v678, -inf
        %683 = vmax.xlane.f32.xlu0 %v682
        %v684 = vpop.xlane.xlu0 %683
        %v685 = vsub.f32 %v677, %v681
        %v686 = vsub.f32 %v678, %v684
        %v687 = vmul.f32 %v685, 1.442695
        %v688 = vpow.pop %v687
        %v689 = vmul.f32 %v686, 1.442695
        %v690 = vpow.pop %v689
        %v691 = vsel %vm444, %v688, 0.0
        %692 = vadd.xlane.f32.xlu0 %v691
        %v693 = vpop.xlane.xlu0 %692
        %v694 = vsel %vm444, %v690, 0.0
        %695 = vadd.xlane.f32.xlu0 %v694
        %v696 = vpop.xlane.xlu0 %695
        %v697 = vrcp.pop %v693
        %v698 = vrcp.pop %v696
        %v699 = vmul.f32 %v688, %v697
        %v700 = vmul.f32 %v690, %v698
        %703 = vrot.lane.b32.xlu0 %v632, 64
        %v704 = vpop.permute.xlu0 %703
        %705 = vrot.lane.b32.xlu0 %v633, 64
        %v706 = vpop.permute.xlu0 %705
        %v710 = vsel %vm444, %v699, 0
        %v713 = vsel %vm444, %v700, 0
        %715 = vmatpush.msra.mxu0 0.0
        %716 = vmatpush.msra.mxu0 0.0
        %717 = vmatpush.msra.mxu0 0.0
        %718 = vmatpush.msra.mxu0 0.0
        %719 = vmatpush.msra.mxu0 0.0
        %720 = vmatpush.msra.mxu0 0.0
        %721 = vmatpush.msra.mxu0 0.0
        %722 = vmatpush.msra.mxu0 0.0
        %723 = vmatpush.msra.mxu0 0.0
        %724 = vmatpush.msra.mxu0 0.0
        %725 = vmatpush.msra.mxu0 0.0
        %726 = vmatpush.msra.mxu0 0.0
        %727 = vmatpush.msra.mxu0 0.0
        %728 = vmatpush.msra.mxu0 0.0
        %729 = vmatpush.msra.mxu0 %v706
        %730 = vmatpush.msra.mxu0 %v704
        %731 = vmatmul.f32.gmra.mxu0 %v710
        %v732 = vpop.f32.mrf.mxu0
        %v733 = vadd.f32 0.0, %v732
        %734 = vmatmul.f32.gmra.mxu0 %v713
        %v735 = vpop.f32.mrf.mxu0
        %v736 = vadd.f32 0.0, %v735
        %737 = vdwg.mxu0
        %s738 = scalar_lea.vmem %s381, 32 [#allocation11]
        %739 = vst.msk [vmem:[%s738] sm:$0xff] %vm444, %v699
        %740 = vst.msk [vmem:[%s738 + $0x8] sm:$0xff] %vm444, %v700
        %743 = vrot.lane.b32.xlu0 %v733, 64
        %v744 = vpop.permute.xlu0 %743
        %745 = vrot.lane.b32.xlu0 %v736, 64
        %v746 = vpop.permute.xlu0 %745
        %vm749 = vcmask 785920
        %750 = vst.msk [vmem:[%s374] sm:$0xff] %vm749, %v744
        %751 = vst.msk [vmem:[%s374 + $0x8] sm:$0xff] %vm749, %v746
        %v752 = vld [vmem:[%s314] sm:$0xff]
        %v753 = vld [vmem:[%s314 + $0x8] sm:$0xff]
        %v754 = vmul.f32 %v752, 0.17677669
        %v755 = vmul.f32 %v753, 0.17677669
        %v756 = vld [vmem:[%s324] sm:$0xff]
        %v757 = vld [vmem:[%s324 + $0x8] sm:$0xff]
        %v758 = vld [vmem:[%s334] sm:$0xff]
        %v759 = vld [vmem:[%s334 + $0x8] sm:$0xff]
        %762 = vrot.lane.b32.xlu0 %v754, 32
        %v763 = vpop.permute.xlu0 %762
        %764 = vrot.lane.b32.xlu0 %v755, 32
        %v765 = vpop.permute.xlu0 %764
        %768 = vrot.lane.b32.xlu0 %v756, 32
        %v769 = vpop.permute.xlu0 %768
        %770 = vrot.lane.b32.xlu0 %v757, 32
        %v771 = vpop.permute.xlu0 %770
        %v772 = vsel %vm400, %v763, 0
        %v774 = vsel %vm400, %v765, 0
        %v776 = vsel %vm400, %v769, 0
        %v778 = vsel %vm400, %v771, 0
        %780 = vmatpush.xpose.msra.mxu0 0.0
        %781 = vmatpush.xpose.msra.mxu0 0.0
        %782 = vmatpush.xpose.msra.mxu0 0.0
        %783 = vmatpush.xpose.msra.mxu0 0.0
        %784 = vmatpush.xpose.msra.mxu0 0.0
        %785 = vmatpush.xpose.msra.mxu0 0.0
        %786 = vmatpush.xpose.msra.mxu0 0.0
        %787 = vmatpush.xpose.msra.mxu0 0.0
        %788 = vmatpush.xpose.msra.mxu0 0.0
        %789 = vmatpush.xpose.msra.mxu0 0.0
        %790 = vmatpush.xpose.msra.mxu0 0.0
        %791 = vmatpush.xpose.msra.mxu0 0.0
        %792 = vmatpush.xpose.msra.mxu0 0.0
        %793 = vmatpush.xpose.msra.mxu0 0.0
        %794 = vmatpush.xpose.msra.mxu0 %v778
        %795 = vmatpush.xpose.msra.mxu0 %v776
        %796 = vmatmul.f32.gmra.mxu0 %v772
        %v797 = vpop.f32.mrf.mxu0
        %v798 = vadd.f32 0.0, %v797
        %799 = vmatmul.f32.gmra.mxu0 %v774
        %v800 = vpop.f32.mrf.mxu0
        %v801 = vadd.f32 0.0, %v800
        %802 = vdwg.mxu0
        %v803 = vsel %vm440, -3.4028235e+38, %v798
        %v804 = vsel %vm441, -3.4028235e+38, %v801
        %v805 = vsel %vm444, %v803, -inf
        %806 = vmax.xlane.f32.xlu0 %v805
        %v807 = vpop.xlane.xlu0 %806
        %v808 = vsel %vm444, %v804, -inf
        %809 = vmax.xlane.f32.xlu0 %v808
        %v810 = vpop.xlane.xlu0 %809
        %v811 = vsub.f32 %v803, %v807
        %v812 = vsub.f32 %v804, %v810
        %v813 = vmul.f32 %v811, 1.442695
        %v814 = vpow.pop %v813
        %v815 = vmul.f32 %v812, 1.442695
        %v816 = vpow.pop %v815
        %v817 = vsel %vm444, %v814, 0.0
        %818 = vadd.xlane.f32.xlu0 %v817
        %v819 = vpop.xlane.xlu0 %818
        %v820 = vsel %vm444, %v816, 0.0
        %821 = vadd.xlane.f32.xlu0 %v820
        %v822 = vpop.xlane.xlu0 %821
        %v823 = vrcp.pop %v819
        %v824 = vrcp.pop %v822
        %v825 = vmul.f32 %v814, %v823
        %v826 = vmul.f32 %v816, %v824
        %829 = vrot.lane.b32.xlu0 %v758, 32
        %v830 = vpop.permute.xlu0 %829
        %831 = vrot.lane.b32.xlu0 %v759, 32
        %v832 = vpop.permute.xlu0 %831
        %v836 = vsel %vm444, %v825, 0
        %v839 = vsel %vm444, %v826, 0
        %841 = vmatpush.msra.mxu0 0.0
        %842 = vmatpush.msra.mxu0 0.0
        %843 = vmatpush.msra.mxu0 0.0
        %844 = vmatpush.msra.mxu0 0.0
        %845 = vmatpush.msra.mxu0 0.0
        %846 = vmatpush.msra.mxu0 0.0
        %847 = vmatpush.msra.mxu0 0.0
        %848 = vmatpush.msra.mxu0 0.0
        %849 = vmatpush.msra.mxu0 0.0
        %850 = vmatpush.msra.mxu0 0.0
        %851 = vmatpush.msra.mxu0 0.0
        %852 = vmatpush.msra.mxu0 0.0
        %853 = vmatpush.msra.mxu0 0.0
        %854 = vmatpush.msra.mxu0 0.0
        %855 = vmatpush.msra.mxu0 %v832
        %856 = vmatpush.msra.mxu0 %v830
        %857 = vmatmul.f32.gmra.mxu0 %v836
        %v858 = vpop.f32.mrf.mxu0
        %v859 = vadd.f32 0.0, %v858
        %860 = vmatmul.f32.gmra.mxu0 %v839
        %v861 = vpop.f32.mrf.mxu0
        %v862 = vadd.f32 0.0, %v861
        %863 = vdwg.mxu0
        %s864 = scalar_lea.vmem %s381, 48 [#allocation11]
        %865 = vst.msk [vmem:[%s864] sm:$0xff] %vm444, %v825
        %866 = vst.msk [vmem:[%s864 + $0x8] sm:$0xff] %vm444, %v826
        %869 = vrot.lane.b32.xlu0 %v859, 96
        %v870 = vpop.permute.xlu0 %869
        %871 = vrot.lane.b32.xlu0 %v862, 96
        %v872 = vpop.permute.xlu0 %871
        %vm875 = vcmask 1048320
        %876 = vst.msk [vmem:[%s374] sm:$0xff] %vm875, %v870
        %877 = vst.msk [vmem:[%s374 + $0x8] sm:$0xff] %vm875, %v872
        %s878 = sand.u32 %s158, 1
        %s879 = scalar_lea.sflag [#allocation4], %s878
        %s880 = sand.u32 %s158, 1
        %s881 = smul.addr %s880, 16
        %s882 = scalar_lea.vmem [#allocation10], %s881
        %s883 = sand.u32 %s186, 1
        %s884 = scalar_lea.sflag [#allocation12], %s883
        %s885 = sand.u32 %s186, 1
        %s886 = smul.addr %s885, 64
        %s887 = scalar_lea.vmem [#allocation11], %s886
        // Predicated region
        $region53: #{tpu_custom_call.1} parent=35 // pred_check
          %p888 = pneg %p168
        $region54: #{tpu_custom_call.1} parent=35 // pred_check_branch
          %890 = sbr.rel (%p888) target = $region56
        $region55: #{tpu_custom_call.1} parent=35 // pred_region
          %s891 = smul.u32 2, %s35
          %893 = vsyncadd %s879, 0
          %s894 = smul.addr %s34, 2
          %s895 = sadd.s32 %s891, %s894
          %s896 = smul.addr %s895, 8
          %s897 = scalar_lea.hbm %s4, %s896
          %s898 = sshll.u32 %s882, 4
          %s899 = int_to_ptr.vmem [resolvable:$true] %s898
          %s900 = sshll.u32 %s897, 4
          %s901 = int_to_ptr.hbm [resolvable:$true] %s900
          %906 = dma.vmem_to_hbm [thread:$0]  %s899, 256, %s901, %s879, 128, 128, 8
        $region56: #{tpu_custom_call.1} parent=35 // pred_fallthru
          _
        // Predicated region
        $region57: #{tpu_custom_call.1} parent=35 // pred_check
          %p907 = pneg %p196
        $region58: #{tpu_custom_call.1} parent=35 // pred_check_branch
          %909 = sbr.rel (%p907) target = $region60
        $region59: #{tpu_custom_call.1} parent=35 // pred_region
          %s910 = smul.u32 2, %s35
          %912 = vsyncadd %s884, 0
          %s913 = smul.addr %s34, 8
          %s914 = sadd.s32 %s910, %s913
          %s915 = smul.addr %s914, 8
          %s916 = scalar_lea.hbm %s5, %s915
          %s917 = sshll.u32 %s887, 4
          %s918 = int_to_ptr.vmem [resolvable:$true] %s917
          %s919 = sshll.u32 %s916, 4
          %s920 = int_to_ptr.hbm [resolvable:$true] %s919
          %925 = dma.vmem_to_hbm [thread:$0]  %s918, 1024, %s920, %s884, 128, 128, 8
        $region60: #{tpu_custom_call.1} parent=35 // pred_fallthru
          _
      $region36: #{tpu_custom_call.1} parent=5 // pred_fallthru
        _
      %p926 = scmp.le.s32.totalorder 2, %s25
      // Predicated region
      $region61: #{tpu_custom_call.1} parent=5 // pred_check
        %p927 = pneg %p926
      $region62: #{tpu_custom_call.1} parent=5 // pred_check_branch
        %929 = sbr.rel (%p927) target = $region64
      $region63: #{tpu_custom_call.1} parent=5 // pred_region
        %s930 = ssub.s32 %s25, 2
        // Predicated region
        $region65: #{tpu_custom_call.1} parent=63 // pred_check
          %p931 = pneg %p174
        $region66: #{tpu_custom_call.1} parent=63 // pred_check_branch
          %933 = sbr.rel (%p931) target = $region68
        $region67: #{tpu_custom_call.1} parent=63 // pred_region
          %s934 = sand.u32 %s159, 1
          %s935 = scalar_lea.sflag [#allocation4], %s934
          %s936 = sand.u32 %s159, 1
          %s937 = smul.addr %s936, 16
          %s938 = scalar_lea.vmem [#allocation10], %s937
          %940 = dma.done %s935, 256
        $region68: #{tpu_custom_call.1} parent=63 // pred_fallthru
          _
        // Predicated region
        $region69: #{tpu_custom_call.1} parent=63 // pred_check
          %p941 = pneg %p202
        $region70: #{tpu_custom_call.1} parent=63 // pred_check_branch
          %943 = sbr.rel (%p941) target = $region72
        $region71: #{tpu_custom_call.1} parent=63 // pred_region
          %s944 = sand.u32 %s187, 1
          %s945 = scalar_lea.sflag [#allocation12], %s944
          %s946 = sand.u32 %s187, 1
          %s947 = smul.addr %s946, 64
          %s948 = scalar_lea.vmem [#allocation11], %s947
          %950 = dma.done %s945, 1024
        $region72: #{tpu_custom_call.1} parent=63 // pred_fallthru
          _
      $region64: #{tpu_custom_call.1} parent=5 // pred_fallthru
        _
    $region6: #{tpu_custom_call.1} parent=1 // loop_footer
      %s29 = sadd.s32 1, %s25
    $region7: #{tpu_custom_call.1} parent=1 // loop_footer_branch
      %24 = sbr.rel target = $region3
    $region8: #{tpu_custom_call.1} parent=1 // loop_exit
      _
    %951 = vsyncpa [#allocation3], 1
    %s952 = scalar_lea.sflag [#allocation3], 1
    %953 = vsyncpa %s952, 1
    %954 = vsyncpa [#allocation6], 1
    %s955 = scalar_lea.sflag [#allocation6], 1
    %956 = vsyncpa %s955, 1
    %957 = vsyncpa [#allocation9], 1
    %958 = vsyncpa [#allocation4], 1
    %s959 = scalar_lea.sflag [#allocation4], 1
    %960 = vsyncpa %s959, 1
    %961 = vsyncpa [#allocation12], 1
    %s962 = scalar_lea.sflag [#allocation12], 1
    %963 = vsyncpa %s962, 1

</llo_original>
